<compile_context>
chip_gen: v7x
topology: tpu7x:2x2x1
jax: 0.10.0
libtpu: 0.0.40
codegen_flags: <defaults>
</compile_context>

<pallas_src>
import jax
import jax.numpy as jnp
from jax.experimental import pallas as pl
from jax.experimental.pallas import tpu as pltpu


def _round_up(v: int, m: int) -> int:
    return (v + m - 1) // m * m


def _vmem_capacity_bytes() -> int:
    """Per-TensorCore VMEM capacity; conservative default if the query fails."""
    try:
        cap = getattr(pltpu.get_tpu_info(), "vmem_capacity_bytes", None)
        if cap:
            return int(cap)
    except Exception:
        pass
    return 64 * 1024 * 1024  # v7x (smallest of v5e/v6e/v7x)


def _patch_embed_kernel(p_ref, w_ref, b_ref, o_ref):
    # p_ref: (tm, K) bf16 patches (streamed), w_ref: (K, tn) bf16 (resident),
    # b_ref: (1, tn) f32 (resident), o_ref: (tm, tn).
    acc = jnp.dot(p_ref[...], w_ref[...], preferred_element_type=jnp.float32)
    o_ref[...] = (acc + b_ref[...]).astype(o_ref.dtype)


def patch_embedding_forward(x, weight, bias, patch_size: int, *, out_dtype=None):
    """x: (B, C, H, W); weight: (E, C, P, P); bias: (E,).  Returns (B, N, E).

    out_dtype: output dtype (default: x.dtype).  Pass jnp.bfloat16 when the
    consumer (LayerNorm / next matmul) accepts it -- the output is the largest
    single HBM stream, so this cuts total kernel bytes ~30% at ViT scale.
    """
    B, C, H, W = x.shape
    E = weight.shape[0]
    P = patch_size
    image_resolution = x.shape[-1]
    assert image_resolution % P == 0 and H % P == 0, (
        f"Input image size must be divisble by patch size, "
        f"image shape: {image_resolution}, patch size: {P}")
    Hp, Wp = H // P, W // P
    N = Hp * Wp
    K = C * P * P
    M = B * N
    out_dtype = x.dtype if out_dtype is None else out_dtype
    out_bytes = jnp.dtype(out_dtype).itemsize

    # ---- patch extraction (XLA side; see TODO above) --------------------------
    # bf16 matmul inputs -> native MXU path, f32 accumulation in-kernel.  (Keep
    # the weight in f32 instead if bit-level parity with the torch module
    # matters; cost delta is small on v5e.)
    x_bf = x.astype(jnp.bfloat16)
    w_bf = weight.astype(jnp.bfloat16)
    # (B,C,Hp,P,Wp,P) -> (B,Hp,Wp,C,P,P) -> (M,K): row-major patch grid,
    # (c, dh, dw)-ordered columns, matching Conv2d(k=P, s=P).
    patches = x_bf.reshape(B, C, Hp, P, Wp, P).transpose(0, 2, 4, 1, 3, 5)
    patches = patches.reshape(M, K)
    w_mat = w_bf.reshape(E, K).T                      # (K, E)
    b_mat = bias.astype(jnp.float32).reshape(1, E)    # (1, E)

    # ---- padding ---------------------------------------------------------------
    K_pad = _round_up(K, 128)   # exact zero-pad; clean MXU / bf16-sublane packing
    E_pad = _round_up(E, 128)   # lane-dense output stores (no masked vst)
    M_pad = _round_up(M, 8)

    # ---- VMEM-budget-driven tile selection -------------------------------------
    vmem_cap = _vmem_capacity_bytes()
    budget = int(vmem_cap * 0.70)      # leave headroom for XLA fusions / scratch

    def fp(tm_, tn_, w_bufs=2):        # conservative: double-buffered weight
        return (2 * tm_ * K_pad * 2            # patches (double-buffered, bf16)
                + w_bufs * K_pad * tn_ * 2     # weight  (bf16)
                + w_bufs * tn_ * 4             # bias    (f32)
                + 2 * tm_ * tn_ * out_bytes)   # output

    tn = E_pad                          # prefer n_e == 1: never re-stream patches
    tm = min(1024, M_pad)               # sweepable 1024..2048 on 128 MiB parts
    while tm > 8 and fp(tm, tn) > budget:
        tm = max(8, _round_up(tm // 2, 8))
    if fp(tm, tn) > budget:
        # Last resort: split E.  Every extra E tile re-reads the whole patches
        # array from HBM, so this only triggers for extreme K*E products.
        tn = 512
        while tn > 128 and fp(tm, tn) > budget:
            tn //= 2
        E_pad = _round_up(E, tn)
    M_pad = _round_up(M_pad, tm)
    n_m = M_pad // tm
    n_e = E_pad // tn

    if M_pad != M or K_pad != K:
        patches = jnp.pad(patches, ((0, M_pad - M), (0, K_pad - K)))
    if K_pad != K or E_pad != E:
        w_mat = jnp.pad(w_mat, ((0, K_pad - K), (0, E_pad - E)))
    if E_pad != E:
        b_mat = jnp.pad(b_mat, ((0, 0), (0, E_pad - E)))

    # Footprint-derived VMEM cap (+ headroom), never a flat 48 MiB.
    vmem_limit = min(int(vmem_cap * 0.85), fp(tm, tn) + 8 * 1024 * 1024)

    cost = pl.CostEstimate(
        flops=2 * M_pad * K_pad * E_pad,
        transcendentals=0,
        # patches are re-streamed once per E tile (n_e == 1 in practice).
        bytes_accessed=(n_e * M_pad * K_pad * 2 + K_pad * E_pad * 2
                        + E_pad * 4 + M_pad * E_pad * out_bytes),
    )

    # Grid: (E-tiles, M-tiles), M innermost => weight/bias blocks stay resident
    # in VMEM across the whole M sweep.  E axis marked "arbitrary" when n_e > 1
    # so megacore sharding always splits M (never re-streams patches per core).
    dim_sem = ("parallel" if n_e == 1 else "arbitrary", "parallel")

    def run(single_buffer_resident: bool):
        if single_buffer_resident:
            # Weight/bias never change across the grid (n_e == 1): one VMEM
            # buffer suffices; frees K*tn*2 bytes vs default double-buffering.
            w_spec = pl.BlockSpec((K_pad, tn), lambda j, i: (0, j),
                                  pipeline_mode=pl.Buffered(1))
            b_spec = pl.BlockSpec((1, tn), lambda j, i: (0, j),
                                  pipeline_mode=pl.Buffered(1))
        else:
            w_spec = pl.BlockSpec((K_pad, tn), lambda j, i: (0, j))
            b_spec = pl.BlockSpec((1, tn), lambda j, i: (0, j))
        return pl.pallas_call(
            _patch_embed_kernel,
            out_shape=jax.ShapeDtypeStruct((M_pad, E_pad), out_dtype),
            grid_spec=pltpu.PrefetchScalarGridSpec(
                num_scalar_prefetch=0,
                grid=(n_e, n_m),
                in_specs=[
                    pl.BlockSpec((tm, K_pad), lambda j, i: (i, 0)),  # patches
                    w_spec,                                          # weight
                    b_spec,                                          # bias
                ],
                out_specs=pl.BlockSpec((tm, tn), lambda j, i: (i, j)),
            ),
            compiler_params=pltpu.CompilerParams(
                dimension_semantics=dim_sem,
                vmem_limit_bytes=vmem_limit,
            ),
            cost_estimate=cost,
        )(patches, w_mat, b_mat)

    if n_e == 1:
        try:
            out = run(True)
        except Exception:
            # Installed jax rejected pl.Buffered(1); fall back to defaults.
            out = run(False)
    else:
        out = run(False)

    return out[:M, :E].reshape(B, N, E)


if __name__ == "__main__":
    # Small but module-consistent shapes: in_channels=3, patch_size=16,
    # 32x32 images (4 patches each), embedding_dim=32, batch=2.
    B, C, H, W = 2, 3, 32, 32
    E = 32
    P = 16

    key = jax.random.PRNGKey(0)
    kx, kw, kb = jax.random.split(key, 3)
    x = jax.random.normal(kx, (B, C, H, W), dtype=jnp.float32)
    weight = jax.random.normal(kw, (E, C, P, P), dtype=jnp.float32) * 0.02
    bias = jax.random.normal(kb, (E,), dtype=jnp.float32) * 0.02

    out = jax.block_until_ready(patch_embedding_forward(x, weight, bias, P))

    # Pure-JAX f32 reference (Conv2d(k=P, s=P) -> flatten -> permute).
    Hp, Wp = H // P, W // P
    ref_patches = x.reshape(B, C, Hp, P, Wp, P).transpose(0, 2, 4, 1, 3, 5)
    ref_patches = ref_patches.reshape(B, Hp * Wp, C * P * P)
    ref = jnp.einsum("bnk,ek->bne", ref_patches, weight.reshape(E, -1)) + bias

    assert out.shape == (B, Hp * Wp, E)
    # bf16 matmul inputs with f32 accumulation -> loose tolerance vs f32 ref.
    assert jnp.allclose(out, ref, atol=2e-2, rtol=2e-2), (
        float(jnp.max(jnp.abs(out - ref))))

    # bf16-output option (halves the largest HBM stream for bf16 consumers).
    out_bf16 = jax.block_until_ready(
        patch_embedding_forward(x, weight, bias, P, out_dtype=jnp.bfloat16))
    assert out_bf16.dtype == jnp.bfloat16
    assert jnp.allclose(out_bf16.astype(jnp.float32), ref, atol=5e-2, rtol=5e-2)

    print("KERNEL_OK")
</pallas_src>

<mosaic_0001>
module attributes {stable_mosaic.version = 11 : i64} {
  func.func @_patch_embed_kernel(%arg0: i32, %arg1: i32, %arg2: memref<8x768xbf16, #tpu.memory_space<vmem>>, %arg3: memref<768x128xbf16, #tpu.memory_space<vmem>>, %arg4: memref<1x128xf32, #tpu.memory_space<vmem>>, %arg5: memref<8x128xf32, #tpu.memory_space<vmem>>) attributes {dimension_semantics = [#tpu.dimension_semantics<parallel>, #tpu.dimension_semantics<parallel>], iteration_bounds = array<i64: 1, 1>, scalar_prefetch = 0 : i64, scratch_operands = 0 : i64, tpu.core_type = #tpu.core_type<tc>, window_params = [{transform_indices = @transform_0, window_bounds = array<i64: 8, 768>}, {pipeline_mode = #tpu.pipeline_mode<synchronous>, transform_indices = @transform_1, window_bounds = array<i64: 768, 128>}, {pipeline_mode = #tpu.pipeline_mode<synchronous>, transform_indices = @transform_2, window_bounds = array<i64: 1, 128>}, {transform_indices = @transform_3, window_bounds = array<i64: 8, 128>}]} {
    %c0 = arith.constant 0 : index
    %c0_0 = arith.constant 0 : index
    %0 = vector.load %arg2[%c0, %c0_0] : memref<8x768xbf16, #tpu.memory_space<vmem>>, vector<8x768xbf16>
    %c0_1 = arith.constant 0 : index
    %c0_2 = arith.constant 0 : index
    %1 = vector.load %arg3[%c0_1, %c0_2] : memref<768x128xbf16, #tpu.memory_space<vmem>>, vector<768x128xbf16>
    %cst = arith.constant dense<0.000000e+00> : vector<8x128xf32>
    %2 = tpu.matmul %0, %1, %cst {dimension_numbers = #tpu.dot_dimension_numbers<[1], [0], [0], [1], [0, 0, 1, 1], [], []>} : vector<8x768xbf16>, vector<768x128xbf16>, vector<8x128xf32> -> vector<8x128xf32>
    %c0_3 = arith.constant 0 : index
    %c0_4 = arith.constant 0 : index
    %3 = vector.load %arg4[%c0_3, %c0_4] : memref<1x128xf32, #tpu.memory_space<vmem>>, vector<1x128xf32>
    %4 = vector.broadcast %3 : vector<1x128xf32> to vector<8x128xf32>
    %5 = arith.addf %2, %4 : vector<8x128xf32>
    %c0_5 = arith.constant 0 : index
    %c0_6 = arith.constant 0 : index
    %6 = vector.load %arg5[%c0_5, %c0_6] : memref<8x128xf32, #tpu.memory_space<vmem>>, vector<8x128xf32>
    tpu.vector_store %arg5[%c0_5, %c0_6], %5 {strides = array<i32>} : memref<8x128xf32, #tpu.memory_space<vmem>>, vector<8x128xf32>,
    return
  }
  func.func @transform_0(%arg0: i32, %arg1: i32) -> (i32, i32) {
    %c0_i32 = arith.constant 0 : i32
    %c0_i32_0 = arith.constant 0 : i32
    return %arg1, %c0_i32 : i32, i32
  }
  func.func @transform_1(%arg0: i32, %arg1: i32) -> (i32, i32) {
    %c0_i32 = arith.constant 0 : i32
    %c0_i32_0 = arith.constant 0 : i32
    return %c0_i32, %arg0 : i32, i32
  }
  func.func @transform_2(%arg0: i32, %arg1: i32) -> (i32, i32) {
    %c0_i32 = arith.constant 0 : i32
    %c0_i32_0 = arith.constant 0 : i32
    return %c0_i32, %arg0 : i32, i32
  }
  func.func @transform_3(%arg0: i32, %arg1: i32) -> (i32, i32) {
    %c0_i32 = arith.constant 0 : i32
    return %arg1, %arg0 : i32, i32
  }
}

module attributes {stable_mosaic.version = 11 : i64} {
  func.func @_patch_embed_kernel(%arg0: i32, %arg1: i32, %arg2: memref<8x768xbf16, #tpu.memory_space<vmem>>, %arg3: memref<768x128xbf16, #tpu.memory_space<vmem>>, %arg4: memref<1x128xf32, #tpu.memory_space<vmem>>, %arg5: memref<8x128xf32, #tpu.memory_space<vmem>>) attributes {dimension_semantics = [#tpu.dimension_semantics<parallel>, #tpu.dimension_semantics<parallel>], iteration_bounds = array<i64: 1, 1>, scalar_prefetch = 0 : i64, scratch_operands = 0 : i64, tpu.core_type = #tpu.core_type<tc>, window_params = [{transform_indices = @transform_0, window_bounds = array<i64: 8, 768>}, {transform_indices = @transform_1, window_bounds = array<i64: 768, 128>}, {transform_indices = @transform_2, window_bounds = array<i64: 1, 128>}, {transform_indices = @transform_3, window_bounds = array<i64: 8, 128>}]} {
    %c0 = arith.constant 0 : index
    %c0_0 = arith.constant 0 : index
    %0 = vector.load %arg2[%c0, %c0_0] : memref<8x768xbf16, #tpu.memory_space<vmem>>, vector<8x768xbf16>
    %c0_1 = arith.constant 0 : index
    %c0_2 = arith.constant 0 : index
    %1 = vector.load %arg3[%c0_1, %c0_2] : memref<768x128xbf16, #tpu.memory_space<vmem>>, vector<768x128xbf16>
    %cst = arith.constant dense<0.000000e+00> : vector<8x128xf32>
    %2 = tpu.matmul %0, %1, %cst {dimension_numbers = #tpu.dot_dimension_numbers<[1], [0], [0], [1], [0, 0, 1, 1], [], []>} : vector<8x768xbf16>, vector<768x128xbf16>, vector<8x128xf32> -> vector<8x128xf32>
    %c0_3 = arith.constant 0 : index
    %c0_4 = arith.constant 0 : index
    %3 = vector.load %arg4[%c0_3, %c0_4] : memref<1x128xf32, #tpu.memory_space<vmem>>, vector<1x128xf32>
    %4 = vector.broadcast %3 : vector<1x128xf32> to vector<8x128xf32>
    %5 = arith.addf %2, %4 : vector<8x128xf32>
    %c0_5 = arith.constant 0 : index
    %c0_6 = arith.constant 0 : index
    %6 = vector.load %arg5[%c0_5, %c0_6] : memref<8x128xf32, #tpu.memory_space<vmem>>, vector<8x128xf32>
    tpu.vector_store %arg5[%c0_5, %c0_6], %5 {strides = array<i32>} : memref<8x128xf32, #tpu.memory_space<vmem>>, vector<8x128xf32>,
    return
  }
  func.func @transform_0(%arg0: i32, %arg1: i32) -> (i32, i32) {
    %c0_i32 = arith.constant 0 : i32
    %c0_i32_0 = arith.constant 0 : i32
    return %arg1, %c0_i32 : i32, i32
  }
  func.func @transform_1(%arg0: i32, %arg1: i32) -> (i32, i32) {
    %c0_i32 = arith.constant 0 : i32
    %c0_i32_0 = arith.constant 0 : i32
    return %c0_i32, %arg0 : i32, i32
  }
  func.func @transform_2(%arg0: i32, %arg1: i32) -> (i32, i32) {
    %c0_i32 = arith.constant 0 : i32
    %c0_i32_0 = arith.constant 0 : i32
    return %c0_i32, %arg0 : i32, i32
  }
  func.func @transform_3(%arg0: i32, %arg1: i32) -> (i32, i32) {
    %c0_i32 = arith.constant 0 : i32
    return %arg1, %arg0 : i32, i32
  }
}

</mosaic_0001>

<llo_original>
// kernel: tpu_custom_call.1
$region0: #{tpu_custom_call.1}
  #allocation0 [shape = 'u32[]', space=smem, size = 0x4, offset = 0x4, fixed_abs, tag = 'smem constant byte address 0x4 - core index']
  #allocation1 [shape = 'u32[144,128]{1,0:T(1,128)}', space=vmem, size = 0x12000, scoped, tag = 'internal scratch']
  %s0 = inlined_call_operand.hbm [shape: bf16[8,768], index: 0, kind: input, shape index: {}]
  %s1 = inlined_call_operand.hbm [shape: bf16[768,128], index: 1, kind: input, shape index: {}]
  %s2 = inlined_call_operand.vmem [shape: f32[1,128], index: 2, kind: input, shape index: {}]
  %s3 = inlined_call_operand.hbm [shape: f32[8,128], index: 3, kind: output, shape index: {}]
  %s4 = sld [smem:[#allocation0]]
  $region30: #{tpu_custom_call.1} parent=0
    _
  %s6 = ssub.s32 1, %s4
  %s7 = scalar_select 0, %s6, %s4
  $region1: #{tpu_custom_call.1} parent=0
    #allocation2 [shape = 'u8[12288]{0}', space=vmem, size = 0x3000, scoped, tag = 'input window, operand 0, single buffered']
    #allocation3 [shape = 's32[1]{0}', space=sflag, size = 0x4, scoped, tag = 'scoped memory for tpu_custom_call.1']
    #allocation4 [shape = 's32[1]{0}', space=sflag, size = 0x4, scoped, tag = 'scoped memory for tpu_custom_call.1']
    #allocation5 [shape = 'u8[196608]{0}', space=vmem, size = 0x30000, scoped, tag = 'input window, operand 1, single buffered']
    #allocation6 [shape = 's32[1]{0}', space=sflag, size = 0x4, scoped, tag = 'scoped memory for tpu_custom_call.1']
    #allocation7 [shape = 'u8[4096]{0}', space=vmem, size = 0x1000, scoped, tag = 'output window, operand 0, single buffered']
    %8 = vsyncpa [#allocation3], 0
    %9 = vsyncpa [#allocation6], 0
    %10 = vsyncpa [#allocation4], 0
    // Predicated region
    $region2: #{tpu_custom_call.1} parent=1 // pred_check
      _
    $region3: #{tpu_custom_call.1} parent=1 // pred_check_branch
      %12 = sbr.rel (0) target = $region5
    $region4: #{tpu_custom_call.1} parent=1 // pred_region
      %s14 = ssub.s32 384, 384
      %15 = vsyncadd [#allocation3], %s14
      %s17 = sshll.u32 [#allocation2], 4
      %s18 = int_to_ptr.vmem [resolvable:$true] %s17
      %20 = dma.hbm_to_vmem [thread:$0]  %s0, 384, %s18, [#allocation3]
    $region5: #{tpu_custom_call.1} parent=1 // pred_fallthru
      _
    // Predicated region
    $region6: #{tpu_custom_call.1} parent=1 // pred_check
      _
    $region7: #{tpu_custom_call.1} parent=1 // pred_check_branch
      %22 = sbr.rel (0) target = $region9
    $region8: #{tpu_custom_call.1} parent=1 // pred_region
      %s24 = ssub.s32 6144, 6144
      %25 = vsyncadd [#allocation6], %s24
      %s26 = sshll.u32 [#allocation5], 4
      %s27 = int_to_ptr.vmem [resolvable:$true] %s26
      %32 = dma.hbm_to_vmem [thread:$0]  %s1, 6144, %s27, [#allocation6], 64, 64, 4
    $region9: #{tpu_custom_call.1} parent=1 // pred_fallthru
      _
    // Predicated region
    $region10: #{tpu_custom_call.1} parent=1 // pred_check
      _
    $region11: #{tpu_custom_call.1} parent=1 // pred_check_branch
      %34 = sbr.rel (0) target = $region13
    $region12: #{tpu_custom_call.1} parent=1 // pred_region
      _
    $region13: #{tpu_custom_call.1} parent=1 // pred_fallthru
      _
    // Predicated region
    $region14: #{tpu_custom_call.1} parent=1 // pred_check
      _
    $region15: #{tpu_custom_call.1} parent=1 // pred_check_branch
      %36 = sbr.rel (0) target = $region17
    $region16: #{tpu_custom_call.1} parent=1 // pred_region
      %37 = dma.done [#allocation3], 384
    $region17: #{tpu_custom_call.1} parent=1 // pred_fallthru
      _
    // Predicated region
    $region18: #{tpu_custom_call.1} parent=1 // pred_check
      _
    $region19: #{tpu_custom_call.1} parent=1 // pred_check_branch
      %39 = sbr.rel (0) target = $region21
    $region20: #{tpu_custom_call.1} parent=1 // pred_region
      %40 = dma.done [#allocation6], 6144
    $region21: #{tpu_custom_call.1} parent=1 // pred_fallthru
      _
    %v42 = vld [vmem:[#allocation2] sm:$0xff]
    %v43 = vld [vmem:[#allocation2 + $0x8] sm:$0xff]
    %v44 = vld [vmem:[#allocation2 + $0x10] sm:$0xff]
    %v45 = vld [vmem:[#allocation5] sm:$0xf]
    %v46 = vld [vmem:[#allocation5 + $0x4] sm:$0xf]
    %v47 = vld [vmem:[#allocation5 + $0x8] sm:$0xf]
    %v48 = vld [vmem:[#allocation5 + $0xc] sm:$0xf]
    %v49 = vld [vmem:[#allocation5 + $0x10] sm:$0xf]
    %v50 = vld [vmem:[#allocation5 + $0x14] sm:$0xf]
    %v51 = vld [vmem:[#allocation5 + $0x18] sm:$0xf]
    %v52 = vld [vmem:[#allocation5 + $0x1c] sm:$0xf]
    %v53 = vld [vmem:[#allocation5 + $0x20] sm:$0xf]
    %v54 = vld [vmem:[#allocation5 + $0x24] sm:$0xf]
    %v55 = vld [vmem:[#allocation5 + $0x28] sm:$0xf]
    %v56 = vld [vmem:[#allocation5 + $0x2c] sm:$0xf]
    %v57 = vld [vmem:[#allocation5 + $0x30] sm:$0xf]
    %v58 = vld [vmem:[#allocation5 + $0x34] sm:$0xf]
    %v59 = vld [vmem:[#allocation5 + $0x38] sm:$0xf]
    %v60 = vld [vmem:[#allocation5 + $0x3c] sm:$0xf]
    %v61 = vld [vmem:[#allocation5 + $0x40] sm:$0xf]
    %v62 = vld [vmem:[#allocation5 + $0x44] sm:$0xf]
    %v63 = vld [vmem:[#allocation5 + $0x48] sm:$0xf]
    %v64 = vld [vmem:[#allocation5 + $0x4c] sm:$0xf]
    %v65 = vld [vmem:[#allocation5 + $0x50] sm:$0xf]
    %v66 = vld [vmem:[#allocation5 + $0x54] sm:$0xf]
    %v67 = vld [vmem:[#allocation5 + $0x58] sm:$0xf]
    %v68 = vld [vmem:[#allocation5 + $0x5c] sm:$0xf]
    %v69 = vld [vmem:[#allocation5 + $0x60] sm:$0xf]
    %v70 = vld [vmem:[#allocation5 + $0x64] sm:$0xf]
    %v71 = vld [vmem:[#allocation5 + $0x68] sm:$0xf]
    %v72 = vld [vmem:[#allocation5 + $0x6c] sm:$0xf]
    %v73 = vld [vmem:[#allocation5 + $0x70] sm:$0xf]
    %v74 = vld [vmem:[#allocation5 + $0x74] sm:$0xf]
    %v75 = vld [vmem:[#allocation5 + $0x78] sm:$0xf]
    %v76 = vld [vmem:[#allocation5 + $0x7c] sm:$0xf]
    %v77 = vld [vmem:[#allocation5 + $0x80] sm:$0xf]
    %v78 = vld [vmem:[#allocation5 + $0x84] sm:$0xf]
    %v79 = vld [vmem:[#allocation5 + $0x88] sm:$0xf]
    %v80 = vld [vmem:[#allocation5 + $0x8c] sm:$0xf]
    %v81 = vld [vmem:[#allocation5 + $0x90] sm:$0xf]
    %v82 = vld [vmem:[#allocation5 + $0x94] sm:$0xf]
    %v83 = vld [vmem:[#allocation5 + $0x98] sm:$0xf]
    %v84 = vld [vmem:[#allocation5 + $0x9c] sm:$0xf]
    %v85 = vld [vmem:[#allocation5 + $0xa0] sm:$0xf]
    %v86 = vld [vmem:[#allocation5 + $0xa4] sm:$0xf]
    %v87 = vld [vmem:[#allocation5 + $0xa8] sm:$0xf]
    %v88 = vld [vmem:[#allocation5 + $0xac] sm:$0xf]
    %v89 = vld [vmem:[#allocation5 + $0xb0] sm:$0xf]
    %v90 = vld [vmem:[#allocation5 + $0xb4] sm:$0xf]
    %v91 = vld [vmem:[#allocation5 + $0xb8] sm:$0xf]
    %v92 = vld [vmem:[#allocation5 + $0xbc] sm:$0xf]
    %v93 = vld [vmem:[#allocation5 + $0xc0] sm:$0xf]
    %v94 = vld [vmem:[#allocation5 + $0xc4] sm:$0xf]
    %v95 = vld [vmem:[#allocation5 + $0xc8] sm:$0xf]
    %v96 = vld [vmem:[#allocation5 + $0xcc] sm:$0xf]
    %v97 = vld [vmem:[#allocation5 + $0xd0] sm:$0xf]
    %v98 = vld [vmem:[#allocation5 + $0xd4] sm:$0xf]
    %v99 = vld [vmem:[#allocation5 + $0xd8] sm:$0xf]
    %v100 = vld [vmem:[#allocation5 + $0xdc] sm:$0xf]
    %v101 = vld [vmem:[#allocation5 + $0xe0] sm:$0xf]
    %v102 = vld [vmem:[#allocation5 + $0xe4] sm:$0xf]
    %v103 = vld [vmem:[#allocation5 + $0xe8] sm:$0xf]
    %v104 = vld [vmem:[#allocation5 + $0xec] sm:$0xf]
    %v105 = vld [vmem:[#allocation5 + $0xf0] sm:$0xf]
    %v106 = vld [vmem:[#allocation5 + $0xf4] sm:$0xf]
    %v107 = vld [vmem:[#allocation5 + $0xf8] sm:$0xf]
    %v108 = vld [vmem:[#allocation5 + $0xfc] sm:$0xf]
    %v109 = vld [vmem:[#allocation5 + $0x100] sm:$0xf]
    %v110 = vld [vmem:[#allocation5 + $0x104] sm:$0xf]
    %v111 = vld [vmem:[#allocation5 + $0x108] sm:$0xf]
    %v112 = vld [vmem:[#allocation5 + $0x10c] sm:$0xf]
    %v113 = vld [vmem:[#allocation5 + $0x110] sm:$0xf]
    %v114 = vld [vmem:[#allocation5 + $0x114] sm:$0xf]
    %v115 = vld [vmem:[#allocation5 + $0x118] sm:$0xf]
    %v116 = vld [vmem:[#allocation5 + $0x11c] sm:$0xf]
    %v117 = vld [vmem:[#allocation5 + $0x120] sm:$0xf]
    %v118 = vld [vmem:[#allocation5 + $0x124] sm:$0xf]
    %v119 = vld [vmem:[#allocation5 + $0x128] sm:$0xf]
    %v120 = vld [vmem:[#allocation5 + $0x12c] sm:$0xf]
    %v121 = vld [vmem:[#allocation5 + $0x130] sm:$0xf]
    %v122 = vld [vmem:[#allocation5 + $0x134] sm:$0xf]
    %v123 = vld [vmem:[#allocation5 + $0x138] sm:$0xf]
    %v124 = vld [vmem:[#allocation5 + $0x13c] sm:$0xf]
    %v125 = vld [vmem:[#allocation5 + $0x140] sm:$0xf]
    %v126 = vld [vmem:[#allocation5 + $0x144] sm:$0xf]
    %v127 = vld [vmem:[#allocation5 + $0x148] sm:$0xf]
    %v128 = vld [vmem:[#allocation5 + $0x14c] sm:$0xf]
    %v129 = vld [vmem:[#allocation5 + $0x150] sm:$0xf]
    %v130 = vld [vmem:[#allocation5 + $0x154] sm:$0xf]
    %v131 = vld [vmem:[#allocation5 + $0x158] sm:$0xf]
    %v132 = vld [vmem:[#allocation5 + $0x15c] sm:$0xf]
    %v133 = vld [vmem:[#allocation5 + $0x160] sm:$0xf]
    %v134 = vld [vmem:[#allocation5 + $0x164] sm:$0xf]
    %v135 = vld [vmem:[#allocation5 + $0x168] sm:$0xf]
    %v136 = vld [vmem:[#allocation5 + $0x16c] sm:$0xf]
    %v137 = vld [vmem:[#allocation5 + $0x170] sm:$0xf]
    %v138 = vld [vmem:[#allocation5 + $0x174] sm:$0xf]
    %v139 = vld [vmem:[#allocation5 + $0x178] sm:$0xf]
    %v140 = vld [vmem:[#allocation5 + $0x17c] sm:$0xf]
    %v141 = vld [vmem:[%s2] sm:$0x1]
    %v143 = vlaneseq
    %v144 = vshrl.u32 %v143, 7
    %v145 = vsub.s32 0, %v144
    %v146 = vrot.slane %v141, %v145
    %v151 = vunpack.c.l.b16 %v42
    %v152 = vunpack.c.h.b16 %v42
    %v153 = vunpack.c.l.b16 %v43
    %v154 = vunpack.c.h.b16 %v43
    %v155 = vunpack.c.l.b16 %v44
    %v156 = vunpack.c.h.b16 %v44
    %v157 = vpack.c.b16 %v151, %v151
    %v158 = vpack.c.b16 %v152, %v152
    %v159 = vpack.c.b16 %v153, %v153
    %v160 = vpack.c.b16 %v154, %v154
    %v161 = vpack.c.b16 %v155, %v155
    %v162 = vpack.c.b16 %v156, %v156
    %v265 = vunpack.c.l.b16 %v45
    %v266 = vunpack.c.l.b16 %v46
    %v267 = vunpack.c.l.b16 %v47
    %v268 = vunpack.c.l.b16 %v48
    %v269 = vunpack.c.l.b16 %v49
    %v270 = vunpack.c.l.b16 %v50
    %v271 = vunpack.c.l.b16 %v51
    %v272 = vunpack.c.l.b16 %v52
    %v273 = vunpack.c.l.b16 %v53
    %v274 = vunpack.c.l.b16 %v54
    %v275 = vunpack.c.l.b16 %v55
    %v276 = vunpack.c.l.b16 %v56
    %v277 = vunpack.c.l.b16 %v57
    %v278 = vunpack.c.l.b16 %v58
    %v279 = vunpack.c.l.b16 %v59
    %v280 = vunpack.c.l.b16 %v60
    %v281 = vunpack.c.l.b16 %v61
    %v282 = vunpack.c.l.b16 %v62
    %v283 = vunpack.c.l.b16 %v63
    %v284 = vunpack.c.l.b16 %v64
    %v285 = vunpack.c.l.b16 %v65
    %v286 = vunpack.c.l.b16 %v66
    %v287 = vunpack.c.l.b16 %v67
    %v288 = vunpack.c.l.b16 %v68
    %v289 = vunpack.c.l.b16 %v69
    %v290 = vunpack.c.l.b16 %v70
    %v291 = vunpack.c.l.b16 %v71
    %v292 = vunpack.c.l.b16 %v72
    %v293 = vunpack.c.l.b16 %v73
    %v294 = vunpack.c.l.b16 %v74
    %v295 = vunpack.c.l.b16 %v75
    %v296 = vunpack.c.l.b16 %v76
    %v297 = vunpack.c.l.b16 %v77
    %v298 = vunpack.c.l.b16 %v78
    %v299 = vunpack.c.l.b16 %v79
    %v300 = vunpack.c.l.b16 %v80
    %v301 = vunpack.c.l.b16 %v81
    %v302 = vunpack.c.l.b16 %v82
    %v303 = vunpack.c.l.b16 %v83
    %v304 = vunpack.c.l.b16 %v84
    %v305 = vunpack.c.l.b16 %v85
    %v306 = vunpack.c.l.b16 %v86
    %v307 = vunpack.c.l.b16 %v87
    %v308 = vunpack.c.l.b16 %v88
    %v309 = vunpack.c.l.b16 %v89
    %v310 = vunpack.c.l.b16 %v90
    %v311 = vunpack.c.l.b16 %v91
    %v312 = vunpack.c.l.b16 %v92
    %v313 = vunpack.c.l.b16 %v93
    %v314 = vunpack.c.l.b16 %v94
    %v315 = vunpack.c.l.b16 %v95
    %v316 = vunpack.c.l.b16 %v96
    %v317 = vunpack.c.l.b16 %v97
    %v318 = vunpack.c.l.b16 %v98
    %v319 = vunpack.c.l.b16 %v99
    %v320 = vunpack.c.l.b16 %v100
    %v321 = vunpack.c.l.b16 %v101
    %v322 = vunpack.c.l.b16 %v102
    %v323 = vunpack.c.l.b16 %v103
    %v324 = vunpack.c.l.b16 %v104
    %v325 = vunpack.c.l.b16 %v105
    %v326 = vunpack.c.l.b16 %v106
    %v327 = vunpack.c.l.b16 %v107
    %v328 = vunpack.c.l.b16 %v108
    %v329 = vunpack.c.l.b16 %v109
    %v330 = vunpack.c.l.b16 %v110
    %v331 = vunpack.c.l.b16 %v111
    %v332 = vunpack.c.l.b16 %v112
    %v333 = vunpack.c.l.b16 %v113
    %v334 = vunpack.c.l.b16 %v114
    %v335 = vunpack.c.l.b16 %v115
    %v336 = vunpack.c.l.b16 %v116
    %v337 = vunpack.c.l.b16 %v117
    %v338 = vunpack.c.l.b16 %v118
    %v339 = vunpack.c.l.b16 %v119
    %v340 = vunpack.c.l.b16 %v120
    %v341 = vunpack.c.l.b16 %v121
    %v342 = vunpack.c.l.b16 %v122
    %v343 = vunpack.c.l.b16 %v123
    %v344 = vunpack.c.l.b16 %v124
    %v345 = vunpack.c.l.b16 %v125
    %v346 = vunpack.c.l.b16 %v126
    %v347 = vunpack.c.l.b16 %v127
    %v348 = vunpack.c.l.b16 %v128
    %v349 = vunpack.c.l.b16 %v129
    %v350 = vunpack.c.l.b16 %v130
    %v351 = vunpack.c.l.b16 %v131
    %v352 = vunpack.c.l.b16 %v132
    %v353 = vunpack.c.l.b16 %v133
    %v354 = vunpack.c.l.b16 %v134
    %v355 = vunpack.c.l.b16 %v135
    %v356 = vunpack.c.l.b16 %v136
    %v357 = vunpack.c.l.b16 %v137
    %v358 = vunpack.c.l.b16 %v138
    %v359 = vunpack.c.l.b16 %v139
    %v360 = vunpack.c.l.b16 %v140
    %v361 = vpack.c.b16 %v266, %v265
    %v362 = vpack.c.b16 %v268, %v267
    %v363 = vpack.c.b16 %v270, %v269
    %v364 = vpack.c.b16 %v272, %v271
    %v365 = vpack.c.b16 %v274, %v273
    %v366 = vpack.c.b16 %v276, %v275
    %v367 = vpack.c.b16 %v278, %v277
    %v368 = vpack.c.b16 %v280, %v279
    %v369 = vpack.c.b16 %v282, %v281
    %v370 = vpack.c.b16 %v284, %v283
    %v371 = vpack.c.b16 %v286, %v285
    %v372 = vpack.c.b16 %v288, %v287
    %v373 = vpack.c.b16 %v290, %v289
    %v374 = vpack.c.b16 %v292, %v291
    %v375 = vpack.c.b16 %v294, %v293
    %v376 = vpack.c.b16 %v296, %v295
    %v377 = vpack.c.b16 %v298, %v297
    %v378 = vpack.c.b16 %v300, %v299
    %v379 = vpack.c.b16 %v302, %v301
    %v380 = vpack.c.b16 %v304, %v303
    %v381 = vpack.c.b16 %v306, %v305
    %v382 = vpack.c.b16 %v308, %v307
    %v383 = vpack.c.b16 %v310, %v309
    %v384 = vpack.c.b16 %v312, %v311
    %v385 = vpack.c.b16 %v314, %v313
    %v386 = vpack.c.b16 %v316, %v315
    %v387 = vpack.c.b16 %v318, %v317
    %v388 = vpack.c.b16 %v320, %v319
    %v389 = vpack.c.b16 %v322, %v321
    %v390 = vpack.c.b16 %v324, %v323
    %v391 = vpack.c.b16 %v326, %v325
    %v392 = vpack.c.b16 %v328, %v327
    %v393 = vpack.c.b16 %v330, %v329
    %v394 = vpack.c.b16 %v332, %v331
    %v395 = vpack.c.b16 %v334, %v333
    %v396 = vpack.c.b16 %v336, %v335
    %v397 = vpack.c.b16 %v338, %v337
    %v398 = vpack.c.b16 %v340, %v339
    %v399 = vpack.c.b16 %v342, %v341
    %v400 = vpack.c.b16 %v344, %v343
    %v401 = vpack.c.b16 %v346, %v345
    %v402 = vpack.c.b16 %v348, %v347
    %v403 = vpack.c.b16 %v350, %v349
    %v404 = vpack.c.b16 %v352, %v351
    %v405 = vpack.c.b16 %v354, %v353
    %v406 = vpack.c.b16 %v356, %v355
    %v407 = vpack.c.b16 %v358, %v357
    %v408 = vpack.c.b16 %v360, %v359
    %457 = vmatprep.subr.bf16.mxu0 0
    %458 = vmatpush1.bf16.msra.mxu0 %v361
    %459 = vmatprep.subr.bf16.mxu0 0
    %460 = vmatpush1.bf16.msra.mxu0 %v362
    %461 = vmatprep.subr.bf16.mxu0 0
    %462 = vmatpush1.bf16.msra.mxu0 %v363
    %463 = vmatprep.subr.bf16.mxu0 0
    %464 = vmatpush1.bf16.msra.mxu0 %v364
    %465 = vmatprep.subr.bf16.mxu0 0
    %466 = vmatpush1.bf16.msra.mxu0 %v365
    %467 = vmatprep.subr.bf16.mxu0 0
    %468 = vmatpush1.bf16.msra.mxu0 %v366
    %469 = vmatprep.subr.bf16.mxu0 0
    %470 = vmatpush1.bf16.msra.mxu0 %v367
    %471 = vmatprep.subr.bf16.mxu0 0
    %472 = vmatpush1.bf16.msra.mxu0 %v368
    %473 = vmatprep.subr.bf16.mxu0 0
    %474 = vmatpush1.bf16.msra.mxu0 %v369
    %475 = vmatprep.subr.bf16.mxu0 0
    %476 = vmatpush1.bf16.msra.mxu0 %v370
    %477 = vmatprep.subr.bf16.mxu0 0
    %478 = vmatpush1.bf16.msra.mxu0 %v371
    %479 = vmatprep.subr.bf16.mxu0 0
    %480 = vmatpush1.bf16.msra.mxu0 %v372
    %481 = vmatprep.subr.bf16.mxu0 0
    %482 = vmatpush1.bf16.msra.mxu0 %v373
    %483 = vmatprep.subr.bf16.mxu0 0
    %484 = vmatpush1.bf16.msra.mxu0 %v374
    %485 = vmatprep.subr.bf16.mxu0 0
    %486 = vmatpush1.bf16.msra.mxu0 %v375
    %487 = vmatprep.subr.bf16.mxu0 0
    %488 = vmatpush1.bf16.msra.mxu0 %v376
    %489 = vmatprep.mubr.bf16.mxu0 %v158
    %490 = vmatmul.mubr.bf16.gmra.mrb[0].mxu0 %v157
    %v491 = vpop.f32.mrb[0].mxu0
    %v492 = vadd.f32 %v146, %v491
    %v493 = vpop.f32.mrb[0].mxu0
    %v494 = vpop.f32.mrb[0].mxu0
    %v495 = vpop.f32.mrb[0].mxu0
    %496 = vdwg.mxu0
    %497 = vmatprep.subr.bf16.mxu0 0
    %498 = vmatpush1.bf16.msra.mxu0 %v377
    %499 = vmatprep.subr.bf16.mxu0 0
    %500 = vmatpush1.bf16.msra.mxu0 %v378
    %501 = vmatprep.subr.bf16.mxu0 0
    %502 = vmatpush1.bf16.msra.mxu0 %v379
    %503 = vmatprep.subr.bf16.mxu0 0
    %504 = vmatpush1.bf16.msra.mxu0 %v380
    %505 = vmatprep.subr.bf16.mxu0 0
    %506 = vmatpush1.bf16.msra.mxu0 %v381
    %507 = vmatprep.subr.bf16.mxu0 0
    %508 = vmatpush1.bf16.msra.mxu0 %v382
    %509 = vmatprep.subr.bf16.mxu0 0
    %510 = vmatpush1.bf16.msra.mxu0 %v383
    %511 = vmatprep.subr.bf16.mxu0 0
    %512 = vmatpush1.bf16.msra.mxu0 %v384
    %513 = vmatprep.subr.bf16.mxu0 0
    %514 = vmatpush1.bf16.msra.mxu0 %v385
    %515 = vmatprep.subr.bf16.mxu0 0
    %516 = vmatpush1.bf16.msra.mxu0 %v386
    %517 = vmatprep.subr.bf16.mxu0 0
    %518 = vmatpush1.bf16.msra.mxu0 %v387
    %519 = vmatprep.subr.bf16.mxu0 0
    %520 = vmatpush1.bf16.msra.mxu0 %v388
    %521 = vmatprep.subr.bf16.mxu0 0
    %522 = vmatpush1.bf16.msra.mxu0 %v389
    %523 = vmatprep.subr.bf16.mxu0 0
    %524 = vmatpush1.bf16.msra.mxu0 %v390
    %525 = vmatprep.subr.bf16.mxu0 0
    %526 = vmatpush1.bf16.msra.mxu0 %v391
    %527 = vmatprep.subr.bf16.mxu0 0
    %528 = vmatpush1.bf16.msra.mxu0 %v392
    %529 = vmatprep.mubr.bf16.mxu0 %v160
    %530 = vmatmul.mubr.bf16.gmra.mrb[0].mxu0 %v159
    %v531 = vpop.f32.mrb[0].mxu0
    %v532 = vadd.f32 %v492, %v531
    %v533 = vpop.f32.mrb[0].mxu0
    %v534 = vpop.f32.mrb[0].mxu0
    %v535 = vpop.f32.mrb[0].mxu0
    %536 = vdwg.mxu0
    %537 = vmatprep.subr.bf16.mxu0 0
    %538 = vmatpush1.bf16.msra.mxu0 %v393
    %539 = vmatprep.subr.bf16.mxu0 0
    %540 = vmatpush1.bf16.msra.mxu0 %v394
    %541 = vmatprep.subr.bf16.mxu0 0
    %542 = vmatpush1.bf16.msra.mxu0 %v395
    %543 = vmatprep.subr.bf16.mxu0 0
    %544 = vmatpush1.bf16.msra.mxu0 %v396
    %545 = vmatprep.subr.bf16.mxu0 0
    %546 = vmatpush1.bf16.msra.mxu0 %v397
    %547 = vmatprep.subr.bf16.mxu0 0
    %548 = vmatpush1.bf16.msra.mxu0 %v398
    %549 = vmatprep.subr.bf16.mxu0 0
    %550 = vmatpush1.bf16.msra.mxu0 %v399
    %551 = vmatprep.subr.bf16.mxu0 0
    %552 = vmatpush1.bf16.msra.mxu0 %v400
    %553 = vmatprep.subr.bf16.mxu0 0
    %554 = vmatpush1.bf16.msra.mxu0 %v401
    %555 = vmatprep.subr.bf16.mxu0 0
    %556 = vmatpush1.bf16.msra.mxu0 %v402
    %557 = vmatprep.subr.bf16.mxu0 0
    %558 = vmatpush1.bf16.msra.mxu0 %v403
    %559 = vmatprep.subr.bf16.mxu0 0
    %560 = vmatpush1.bf16.msra.mxu0 %v404
    %561 = vmatprep.subr.bf16.mxu0 0
    %562 = vmatpush1.bf16.msra.mxu0 %v405
    %563 = vmatprep.subr.bf16.mxu0 0
    %564 = vmatpush1.bf16.msra.mxu0 %v406
    %565 = vmatprep.subr.bf16.mxu0 0
    %566 = vmatpush1.bf16.msra.mxu0 %v407
    %567 = vmatprep.subr.bf16.mxu0 0
    %568 = vmatpush1.bf16.msra.mxu0 %v408
    %569 = vmatprep.mubr.bf16.mxu0 %v162
    %570 = vmatmul.mubr.bf16.gmra.mrb[0].mxu0 %v161
    %v571 = vpop.f32.mrb[0].mxu0
    %v572 = vadd.f32 %v532, %v571
    %v573 = vpop.f32.mrb[0].mxu0
    %v574 = vpop.f32.mrb[0].mxu0
    %v575 = vpop.f32.mrb[0].mxu0
    %576 = vdwg.mxu0
    %577 = vst [vmem:[#allocation7] sm:$0xff] %v572
    // Predicated region
    $region22: #{tpu_custom_call.1} parent=1 // pred_check
      _
    $region23: #{tpu_custom_call.1} parent=1 // pred_check_branch
      %579 = sbr.rel (0) target = $region25
    $region24: #{tpu_custom_call.1} parent=1 // pred_region
      %s581 = ssub.s32 128, 128
      %582 = vsyncadd [#allocation4], %s581
      %s584 = sshll.u32 [#allocation7], 4
      %s585 = int_to_ptr.vmem [resolvable:$true] %s584
      %587 = dma.vmem_to_hbm [thread:$0]  %s585, 128, %s3, [#allocation4]
    $region25: #{tpu_custom_call.1} parent=1 // pred_fallthru
      _
    // Predicated region
    $region26: #{tpu_custom_call.1} parent=1 // pred_check
      _
    $region27: #{tpu_custom_call.1} parent=1 // pred_check_branch
      %589 = sbr.rel (0) target = $region29
    $region28: #{tpu_custom_call.1} parent=1 // pred_region
      %590 = dma.done [#allocation4], 128
    $region29: #{tpu_custom_call.1} parent=1 // pred_fallthru
      _
    %591 = vsyncpa [#allocation3], 1
    %592 = vsyncpa [#allocation6], 1
    %593 = vsyncpa [#allocation4], 1

// kernel: tpu_custom_call.1
$region0: #{tpu_custom_call.1}
  #allocation0 [shape = 'u32[]', space=smem, size = 0x4, offset = 0x4, fixed_abs, tag = 'smem constant byte address 0x4 - core index']
  #allocation1 [shape = 'u32[144,128]{1,0:T(1,128)}', space=vmem, size = 0x12000, scoped, tag = 'internal scratch']
  %s0 = inlined_call_operand.hbm [shape: bf16[8,768], index: 0, kind: input, shape index: {}]
  %s1 = inlined_call_operand.hbm [shape: bf16[768,128], index: 1, kind: input, shape index: {}]
  %s2 = inlined_call_operand.vmem [shape: f32[1,128], index: 2, kind: input, shape index: {}]
  %s3 = inlined_call_operand.hbm [shape: f32[8,128], index: 3, kind: output, shape index: {}]
  %s4 = sld [smem:[#allocation0]]
  $region30: #{tpu_custom_call.1} parent=0
    _
  %s6 = ssub.s32 1, %s4
  %s7 = scalar_select 0, %s6, %s4
  $region1: #{tpu_custom_call.1} parent=0
    #allocation2 [shape = 'u8[12288]{0}', space=vmem, size = 0x3000, scoped, tag = 'input window, operand 0, single buffered']
    #allocation3 [shape = 's32[1]{0}', space=sflag, size = 0x4, scoped, tag = 'scoped memory for tpu_custom_call.1']
    #allocation4 [shape = 's32[1]{0}', space=sflag, size = 0x4, scoped, tag = 'scoped memory for tpu_custom_call.1']
    #allocation5 [shape = 'u8[196608]{0}', space=vmem, size = 0x30000, scoped, tag = 'input window, operand 1, single buffered']
    #allocation6 [shape = 's32[1]{0}', space=sflag, size = 0x4, scoped, tag = 'scoped memory for tpu_custom_call.1']
    #allocation7 [shape = 'u8[4096]{0}', space=vmem, size = 0x1000, scoped, tag = 'output window, operand 0, single buffered']
    %8 = vsyncpa [#allocation3], 0
    %9 = vsyncpa [#allocation6], 0
    %10 = vsyncpa [#allocation4], 0
    // Predicated region
    $region2: #{tpu_custom_call.1} parent=1 // pred_check
      _
    $region3: #{tpu_custom_call.1} parent=1 // pred_check_branch
      %12 = sbr.rel (0) target = $region5
    $region4: #{tpu_custom_call.1} parent=1 // pred_region
      %s14 = ssub.s32 384, 384
      %15 = vsyncadd [#allocation3], %s14
      %s17 = sshll.u32 [#allocation2], 4
      %s18 = int_to_ptr.vmem [resolvable:$true] %s17
      %20 = dma.hbm_to_vmem [thread:$0]  %s0, 384, %s18, [#allocation3]
    $region5: #{tpu_custom_call.1} parent=1 // pred_fallthru
      _
    // Predicated region
    $region6: #{tpu_custom_call.1} parent=1 // pred_check
      _
    $region7: #{tpu_custom_call.1} parent=1 // pred_check_branch
      %22 = sbr.rel (0) target = $region9
    $region8: #{tpu_custom_call.1} parent=1 // pred_region
      %s24 = ssub.s32 6144, 6144
      %25 = vsyncadd [#allocation6], %s24
      %s26 = sshll.u32 [#allocation5], 4
      %s27 = int_to_ptr.vmem [resolvable:$true] %s26
      %32 = dma.hbm_to_vmem [thread:$0]  %s1, 6144, %s27, [#allocation6], 64, 64, 4
    $region9: #{tpu_custom_call.1} parent=1 // pred_fallthru
      _
    // Predicated region
    $region10: #{tpu_custom_call.1} parent=1 // pred_check
      _
    $region11: #{tpu_custom_call.1} parent=1 // pred_check_branch
      %34 = sbr.rel (0) target = $region13
    $region12: #{tpu_custom_call.1} parent=1 // pred_region
      _
    $region13: #{tpu_custom_call.1} parent=1 // pred_fallthru
      _
    // Predicated region
    $region14: #{tpu_custom_call.1} parent=1 // pred_check
      _
    $region15: #{tpu_custom_call.1} parent=1 // pred_check_branch
      %36 = sbr.rel (0) target = $region17
    $region16: #{tpu_custom_call.1} parent=1 // pred_region
      %37 = dma.done [#allocation3], 384
    $region17: #{tpu_custom_call.1} parent=1 // pred_fallthru
      _
    // Predicated region
    $region18: #{tpu_custom_call.1} parent=1 // pred_check
      _
    $region19: #{tpu_custom_call.1} parent=1 // pred_check_branch
      %39 = sbr.rel (0) target = $region21
    $region20: #{tpu_custom_call.1} parent=1 // pred_region
      %40 = dma.done [#allocation6], 6144
    $region21: #{tpu_custom_call.1} parent=1 // pred_fallthru
      _
    %v42 = vld [vmem:[#allocation2] sm:$0xff]
    %v43 = vld [vmem:[#allocation2 + $0x8] sm:$0xff]
    %v44 = vld [vmem:[#allocation2 + $0x10] sm:$0xff]
    %v45 = vld [vmem:[#allocation5] sm:$0xf]
    %v46 = vld [vmem:[#allocation5 + $0x4] sm:$0xf]
    %v47 = vld [vmem:[#allocation5 + $0x8] sm:$0xf]
    %v48 = vld [vmem:[#allocation5 + $0xc] sm:$0xf]
    %v49 = vld [vmem:[#allocation5 + $0x10] sm:$0xf]
    %v50 = vld [vmem:[#allocation5 + $0x14] sm:$0xf]
    %v51 = vld [vmem:[#allocation5 + $0x18] sm:$0xf]
    %v52 = vld [vmem:[#allocation5 + $0x1c] sm:$0xf]
    %v53 = vld [vmem:[#allocation5 + $0x20] sm:$0xf]
    %v54 = vld [vmem:[#allocation5 + $0x24] sm:$0xf]
    %v55 = vld [vmem:[#allocation5 + $0x28] sm:$0xf]
    %v56 = vld [vmem:[#allocation5 + $0x2c] sm:$0xf]
    %v57 = vld [vmem:[#allocation5 + $0x30] sm:$0xf]
    %v58 = vld [vmem:[#allocation5 + $0x34] sm:$0xf]
    %v59 = vld [vmem:[#allocation5 + $0x38] sm:$0xf]
    %v60 = vld [vmem:[#allocation5 + $0x3c] sm:$0xf]
    %v61 = vld [vmem:[#allocation5 + $0x40] sm:$0xf]
    %v62 = vld [vmem:[#allocation5 + $0x44] sm:$0xf]
    %v63 = vld [vmem:[#allocation5 + $0x48] sm:$0xf]
    %v64 = vld [vmem:[#allocation5 + $0x4c] sm:$0xf]
    %v65 = vld [vmem:[#allocation5 + $0x50] sm:$0xf]
    %v66 = vld [vmem:[#allocation5 + $0x54] sm:$0xf]
    %v67 = vld [vmem:[#allocation5 + $0x58] sm:$0xf]
    %v68 = vld [vmem:[#allocation5 + $0x5c] sm:$0xf]
    %v69 = vld [vmem:[#allocation5 + $0x60] sm:$0xf]
    %v70 = vld [vmem:[#allocation5 + $0x64] sm:$0xf]
    %v71 = vld [vmem:[#allocation5 + $0x68] sm:$0xf]
    %v72 = vld [vmem:[#allocation5 + $0x6c] sm:$0xf]
    %v73 = vld [vmem:[#allocation5 + $0x70] sm:$0xf]
    %v74 = vld [vmem:[#allocation5 + $0x74] sm:$0xf]
    %v75 = vld [vmem:[#allocation5 + $0x78] sm:$0xf]
    %v76 = vld [vmem:[#allocation5 + $0x7c] sm:$0xf]
    %v77 = vld [vmem:[#allocation5 + $0x80] sm:$0xf]
    %v78 = vld [vmem:[#allocation5 + $0x84] sm:$0xf]
    %v79 = vld [vmem:[#allocation5 + $0x88] sm:$0xf]
    %v80 = vld [vmem:[#allocation5 + $0x8c] sm:$0xf]
    %v81 = vld [vmem:[#allocation5 + $0x90] sm:$0xf]
    %v82 = vld [vmem:[#allocation5 + $0x94] sm:$0xf]
    %v83 = vld [vmem:[#allocation5 + $0x98] sm:$0xf]
    %v84 = vld [vmem:[#allocation5 + $0x9c] sm:$0xf]
    %v85 = vld [vmem:[#allocation5 + $0xa0] sm:$0xf]
    %v86 = vld [vmem:[#allocation5 + $0xa4] sm:$0xf]
    %v87 = vld [vmem:[#allocation5 + $0xa8] sm:$0xf]
    %v88 = vld [vmem:[#allocation5 + $0xac] sm:$0xf]
    %v89 = vld [vmem:[#allocation5 + $0xb0] sm:$0xf]
    %v90 = vld [vmem:[#allocation5 + $0xb4] sm:$0xf]
    %v91 = vld [vmem:[#allocation5 + $0xb8] sm:$0xf]
    %v92 = vld [vmem:[#allocation5 + $0xbc] sm:$0xf]
    %v93 = vld [vmem:[#allocation5 + $0xc0] sm:$0xf]
    %v94 = vld [vmem:[#allocation5 + $0xc4] sm:$0xf]
    %v95 = vld [vmem:[#allocation5 + $0xc8] sm:$0xf]
    %v96 = vld [vmem:[#allocation5 + $0xcc] sm:$0xf]
    %v97 = vld [vmem:[#allocation5 + $0xd0] sm:$0xf]
    %v98 = vld [vmem:[#allocation5 + $0xd4] sm:$0xf]
    %v99 = vld [vmem:[#allocation5 + $0xd8] sm:$0xf]
    %v100 = vld [vmem:[#allocation5 + $0xdc] sm:$0xf]
    %v101 = vld [vmem:[#allocation5 + $0xe0] sm:$0xf]
    %v102 = vld [vmem:[#allocation5 + $0xe4] sm:$0xf]
    %v103 = vld [vmem:[#allocation5 + $0xe8] sm:$0xf]
    %v104 = vld [vmem:[#allocation5 + $0xec] sm:$0xf]
    %v105 = vld [vmem:[#allocation5 + $0xf0] sm:$0xf]
    %v106 = vld [vmem:[#allocation5 + $0xf4] sm:$0xf]
    %v107 = vld [vmem:[#allocation5 + $0xf8] sm:$0xf]
    %v108 = vld [vmem:[#allocation5 + $0xfc] sm:$0xf]
    %v109 = vld [vmem:[#allocation5 + $0x100] sm:$0xf]
    %v110 = vld [vmem:[#allocation5 + $0x104] sm:$0xf]
    %v111 = vld [vmem:[#allocation5 + $0x108] sm:$0xf]
    %v112 = vld [vmem:[#allocation5 + $0x10c] sm:$0xf]
    %v113 = vld [vmem:[#allocation5 + $0x110] sm:$0xf]
    %v114 = vld [vmem:[#allocation5 + $0x114] sm:$0xf]
    %v115 = vld [vmem:[#allocation5 + $0x118] sm:$0xf]
    %v116 = vld [vmem:[#allocation5 + $0x11c] sm:$0xf]
    %v117 = vld [vmem:[#allocation5 + $0x120] sm:$0xf]
    %v118 = vld [vmem:[#allocation5 + $0x124] sm:$0xf]
    %v119 = vld [vmem:[#allocation5 + $0x128] sm:$0xf]
    %v120 = vld [vmem:[#allocation5 + $0x12c] sm:$0xf]
    %v121 = vld [vmem:[#allocation5 + $0x130] sm:$0xf]
    %v122 = vld [vmem:[#allocation5 + $0x134] sm:$0xf]
    %v123 = vld [vmem:[#allocation5 + $0x138] sm:$0xf]
    %v124 = vld [vmem:[#allocation5 + $0x13c] sm:$0xf]
    %v125 = vld [vmem:[#allocation5 + $0x140] sm:$0xf]
    %v126 = vld [vmem:[#allocation5 + $0x144] sm:$0xf]
    %v127 = vld [vmem:[#allocation5 + $0x148] sm:$0xf]
    %v128 = vld [vmem:[#allocation5 + $0x14c] sm:$0xf]
    %v129 = vld [vmem:[#allocation5 + $0x150] sm:$0xf]
    %v130 = vld [vmem:[#allocation5 + $0x154] sm:$0xf]
    %v131 = vld [vmem:[#allocation5 + $0x158] sm:$0xf]
    %v132 = vld [vmem:[#allocation5 + $0x15c] sm:$0xf]
    %v133 = vld [vmem:[#allocation5 + $0x160] sm:$0xf]
    %v134 = vld [vmem:[#allocation5 + $0x164] sm:$0xf]
    %v135 = vld [vmem:[#allocation5 + $0x168] sm:$0xf]
    %v136 = vld [vmem:[#allocation5 + $0x16c] sm:$0xf]
    %v137 = vld [vmem:[#allocation5 + $0x170] sm:$0xf]
    %v138 = vld [vmem:[#allocation5 + $0x174] sm:$0xf]
    %v139 = vld [vmem:[#allocation5 + $0x178] sm:$0xf]
    %v140 = vld [vmem:[#allocation5 + $0x17c] sm:$0xf]
    %v141 = vld [vmem:[%s2] sm:$0x1]
    %v143 = vlaneseq
    %v144 = vshrl.u32 %v143, 7
    %v145 = vsub.s32 0, %v144
    %v146 = vrot.slane %v141, %v145
    %v151 = vunpack.c.l.b16 %v42
    %v152 = vunpack.c.h.b16 %v42
    %v153 = vunpack.c.l.b16 %v43
    %v154 = vunpack.c.h.b16 %v43
    %v155 = vunpack.c.l.b16 %v44
    %v156 = vunpack.c.h.b16 %v44
    %v157 = vpack.c.b16 %v151, %v151
    %v158 = vpack.c.b16 %v152, %v152
    %v159 = vpack.c.b16 %v153, %v153
    %v160 = vpack.c.b16 %v154, %v154
    %v161 = vpack.c.b16 %v155, %v155
    %v162 = vpack.c.b16 %v156, %v156
    %v265 = vunpack.c.l.b16 %v45
    %v266 = vunpack.c.l.b16 %v46
    %v267 = vunpack.c.l.b16 %v47
    %v268 = vunpack.c.l.b16 %v48
    %v269 = vunpack.c.l.b16 %v49
    %v270 = vunpack.c.l.b16 %v50
    %v271 = vunpack.c.l.b16 %v51
    %v272 = vunpack.c.l.b16 %v52
    %v273 = vunpack.c.l.b16 %v53
    %v274 = vunpack.c.l.b16 %v54
    %v275 = vunpack.c.l.b16 %v55
    %v276 = vunpack.c.l.b16 %v56
    %v277 = vunpack.c.l.b16 %v57
    %v278 = vunpack.c.l.b16 %v58
    %v279 = vunpack.c.l.b16 %v59
    %v280 = vunpack.c.l.b16 %v60
    %v281 = vunpack.c.l.b16 %v61
    %v282 = vunpack.c.l.b16 %v62
    %v283 = vunpack.c.l.b16 %v63
    %v284 = vunpack.c.l.b16 %v64
    %v285 = vunpack.c.l.b16 %v65
    %v286 = vunpack.c.l.b16 %v66
    %v287 = vunpack.c.l.b16 %v67
    %v288 = vunpack.c.l.b16 %v68
    %v289 = vunpack.c.l.b16 %v69
    %v290 = vunpack.c.l.b16 %v70
    %v291 = vunpack.c.l.b16 %v71
    %v292 = vunpack.c.l.b16 %v72
    %v293 = vunpack.c.l.b16 %v73
    %v294 = vunpack.c.l.b16 %v74
    %v295 = vunpack.c.l.b16 %v75
    %v296 = vunpack.c.l.b16 %v76
    %v297 = vunpack.c.l.b16 %v77
    %v298 = vunpack.c.l.b16 %v78
    %v299 = vunpack.c.l.b16 %v79
    %v300 = vunpack.c.l.b16 %v80
    %v301 = vunpack.c.l.b16 %v81
    %v302 = vunpack.c.l.b16 %v82
    %v303 = vunpack.c.l.b16 %v83
    %v304 = vunpack.c.l.b16 %v84
    %v305 = vunpack.c.l.b16 %v85
    %v306 = vunpack.c.l.b16 %v86
    %v307 = vunpack.c.l.b16 %v87
    %v308 = vunpack.c.l.b16 %v88
    %v309 = vunpack.c.l.b16 %v89
    %v310 = vunpack.c.l.b16 %v90
    %v311 = vunpack.c.l.b16 %v91
    %v312 = vunpack.c.l.b16 %v92
    %v313 = vunpack.c.l.b16 %v93
    %v314 = vunpack.c.l.b16 %v94
    %v315 = vunpack.c.l.b16 %v95
    %v316 = vunpack.c.l.b16 %v96
    %v317 = vunpack.c.l.b16 %v97
    %v318 = vunpack.c.l.b16 %v98
    %v319 = vunpack.c.l.b16 %v99
    %v320 = vunpack.c.l.b16 %v100
    %v321 = vunpack.c.l.b16 %v101
    %v322 = vunpack.c.l.b16 %v102
    %v323 = vunpack.c.l.b16 %v103
    %v324 = vunpack.c.l.b16 %v104
    %v325 = vunpack.c.l.b16 %v105
    %v326 = vunpack.c.l.b16 %v106
    %v327 = vunpack.c.l.b16 %v107
    %v328 = vunpack.c.l.b16 %v108
    %v329 = vunpack.c.l.b16 %v109
    %v330 = vunpack.c.l.b16 %v110
    %v331 = vunpack.c.l.b16 %v111
    %v332 = vunpack.c.l.b16 %v112
    %v333 = vunpack.c.l.b16 %v113
    %v334 = vunpack.c.l.b16 %v114
    %v335 = vunpack.c.l.b16 %v115
    %v336 = vunpack.c.l.b16 %v116
    %v337 = vunpack.c.l.b16 %v117
    %v338 = vunpack.c.l.b16 %v118
    %v339 = vunpack.c.l.b16 %v119
    %v340 = vunpack.c.l.b16 %v120
    %v341 = vunpack.c.l.b16 %v121
    %v342 = vunpack.c.l.b16 %v122
    %v343 = vunpack.c.l.b16 %v123
    %v344 = vunpack.c.l.b16 %v124
    %v345 = vunpack.c.l.b16 %v125
    %v346 = vunpack.c.l.b16 %v126
    %v347 = vunpack.c.l.b16 %v127
    %v348 = vunpack.c.l.b16 %v128
    %v349 = vunpack.c.l.b16 %v129
    %v350 = vunpack.c.l.b16 %v130
    %v351 = vunpack.c.l.b16 %v131
    %v352 = vunpack.c.l.b16 %v132
    %v353 = vunpack.c.l.b16 %v133
    %v354 = vunpack.c.l.b16 %v134
    %v355 = vunpack.c.l.b16 %v135
    %v356 = vunpack.c.l.b16 %v136
    %v357 = vunpack.c.l.b16 %v137
    %v358 = vunpack.c.l.b16 %v138
    %v359 = vunpack.c.l.b16 %v139
    %v360 = vunpack.c.l.b16 %v140
    %v361 = vpack.c.b16 %v266, %v265
    %v362 = vpack.c.b16 %v268, %v267
    %v363 = vpack.c.b16 %v270, %v269
    %v364 = vpack.c.b16 %v272, %v271
    %v365 = vpack.c.b16 %v274, %v273
    %v366 = vpack.c.b16 %v276, %v275
    %v367 = vpack.c.b16 %v278, %v277
    %v368 = vpack.c.b16 %v280, %v279
    %v369 = vpack.c.b16 %v282, %v281
    %v370 = vpack.c.b16 %v284, %v283
    %v371 = vpack.c.b16 %v286, %v285
    %v372 = vpack.c.b16 %v288, %v287
    %v373 = vpack.c.b16 %v290, %v289
    %v374 = vpack.c.b16 %v292, %v291
    %v375 = vpack.c.b16 %v294, %v293
    %v376 = vpack.c.b16 %v296, %v295
    %v377 = vpack.c.b16 %v298, %v297
    %v378 = vpack.c.b16 %v300, %v299
    %v379 = vpack.c.b16 %v302, %v301
    %v380 = vpack.c.b16 %v304, %v303
    %v381 = vpack.c.b16 %v306, %v305
    %v382 = vpack.c.b16 %v308, %v307
    %v383 = vpack.c.b16 %v310, %v309
    %v384 = vpack.c.b16 %v312, %v311
    %v385 = vpack.c.b16 %v314, %v313
    %v386 = vpack.c.b16 %v316, %v315
    %v387 = vpack.c.b16 %v318, %v317
    %v388 = vpack.c.b16 %v320, %v319
    %v389 = vpack.c.b16 %v322, %v321
    %v390 = vpack.c.b16 %v324, %v323
    %v391 = vpack.c.b16 %v326, %v325
    %v392 = vpack.c.b16 %v328, %v327
    %v393 = vpack.c.b16 %v330, %v329
    %v394 = vpack.c.b16 %v332, %v331
    %v395 = vpack.c.b16 %v334, %v333
    %v396 = vpack.c.b16 %v336, %v335
    %v397 = vpack.c.b16 %v338, %v337
    %v398 = vpack.c.b16 %v340, %v339
    %v399 = vpack.c.b16 %v342, %v341
    %v400 = vpack.c.b16 %v344, %v343
    %v401 = vpack.c.b16 %v346, %v345
    %v402 = vpack.c.b16 %v348, %v347
    %v403 = vpack.c.b16 %v350, %v349
    %v404 = vpack.c.b16 %v352, %v351
    %v405 = vpack.c.b16 %v354, %v353
    %v406 = vpack.c.b16 %v356, %v355
    %v407 = vpack.c.b16 %v358, %v357
    %v408 = vpack.c.b16 %v360, %v359
    %457 = vmatprep.subr.bf16.mxu0 0
    %458 = vmatpush1.bf16.msra.mxu0 %v361
    %459 = vmatprep.subr.bf16.mxu0 0
    %460 = vmatpush1.bf16.msra.mxu0 %v362
    %461 = vmatprep.subr.bf16.mxu0 0
    %462 = vmatpush1.bf16.msra.mxu0 %v363
    %463 = vmatprep.subr.bf16.mxu0 0
    %464 = vmatpush1.bf16.msra.mxu0 %v364
    %465 = vmatprep.subr.bf16.mxu0 0
    %466 = vmatpush1.bf16.msra.mxu0 %v365
    %467 = vmatprep.subr.bf16.mxu0 0
    %468 = vmatpush1.bf16.msra.mxu0 %v366
    %469 = vmatprep.subr.bf16.mxu0 0
    %470 = vmatpush1.bf16.msra.mxu0 %v367
    %471 = vmatprep.subr.bf16.mxu0 0
    %472 = vmatpush1.bf16.msra.mxu0 %v368
    %473 = vmatprep.subr.bf16.mxu0 0
    %474 = vmatpush1.bf16.msra.mxu0 %v369
    %475 = vmatprep.subr.bf16.mxu0 0
    %476 = vmatpush1.bf16.msra.mxu0 %v370
    %477 = vmatprep.subr.bf16.mxu0 0
    %478 = vmatpush1.bf16.msra.mxu0 %v371
    %479 = vmatprep.subr.bf16.mxu0 0
    %480 = vmatpush1.bf16.msra.mxu0 %v372
    %481 = vmatprep.subr.bf16.mxu0 0
    %482 = vmatpush1.bf16.msra.mxu0 %v373
    %483 = vmatprep.subr.bf16.mxu0 0
    %484 = vmatpush1.bf16.msra.mxu0 %v374
    %485 = vmatprep.subr.bf16.mxu0 0
    %486 = vmatpush1.bf16.msra.mxu0 %v375
    %487 = vmatprep.subr.bf16.mxu0 0
    %488 = vmatpush1.bf16.msra.mxu0 %v376
    %489 = vmatprep.mubr.bf16.mxu0 %v158
    %490 = vmatmul.mubr.bf16.gmra.mrb[0].mxu0 %v157
    %v491 = vpop.f32.mrb[0].mxu0
    %v492 = vadd.f32 %v146, %v491
    %v493 = vpop.f32.mrb[0].mxu0
    %v494 = vpop.f32.mrb[0].mxu0
    %v495 = vpop.f32.mrb[0].mxu0
    %496 = vdwg.mxu0
    %497 = vmatprep.subr.bf16.mxu0 0
    %498 = vmatpush1.bf16.msra.mxu0 %v377
    %499 = vmatprep.subr.bf16.mxu0 0
    %500 = vmatpush1.bf16.msra.mxu0 %v378
    %501 = vmatprep.subr.bf16.mxu0 0
    %502 = vmatpush1.bf16.msra.mxu0 %v379
    %503 = vmatprep.subr.bf16.mxu0 0
    %504 = vmatpush1.bf16.msra.mxu0 %v380
    %505 = vmatprep.subr.bf16.mxu0 0
    %506 = vmatpush1.bf16.msra.mxu0 %v381
    %507 = vmatprep.subr.bf16.mxu0 0
    %508 = vmatpush1.bf16.msra.mxu0 %v382
    %509 = vmatprep.subr.bf16.mxu0 0
    %510 = vmatpush1.bf16.msra.mxu0 %v383
    %511 = vmatprep.subr.bf16.mxu0 0
    %512 = vmatpush1.bf16.msra.mxu0 %v384
    %513 = vmatprep.subr.bf16.mxu0 0
    %514 = vmatpush1.bf16.msra.mxu0 %v385
    %515 = vmatprep.subr.bf16.mxu0 0
    %516 = vmatpush1.bf16.msra.mxu0 %v386
    %517 = vmatprep.subr.bf16.mxu0 0
    %518 = vmatpush1.bf16.msra.mxu0 %v387
    %519 = vmatprep.subr.bf16.mxu0 0
    %520 = vmatpush1.bf16.msra.mxu0 %v388
    %521 = vmatprep.subr.bf16.mxu0 0
    %522 = vmatpush1.bf16.msra.mxu0 %v389
    %523 = vmatprep.subr.bf16.mxu0 0
    %524 = vmatpush1.bf16.msra.mxu0 %v390
    %525 = vmatprep.subr.bf16.mxu0 0
    %526 = vmatpush1.bf16.msra.mxu0 %v391
    %527 = vmatprep.subr.bf16.mxu0 0
    %528 = vmatpush1.bf16.msra.mxu0 %v392
    %529 = vmatprep.mubr.bf16.mxu0 %v160
    %530 = vmatmul.mubr.bf16.gmra.mrb[0].mxu0 %v159
    %v531 = vpop.f32.mrb[0].mxu0
    %v532 = vadd.f32 %v492, %v531
    %v533 = vpop.f32.mrb[0].mxu0
    %v534 = vpop.f32.mrb[0].mxu0
    %v535 = vpop.f32.mrb[0].mxu0
    %536 = vdwg.mxu0
    %537 = vmatprep.subr.bf16.mxu0 0
    %538 = vmatpush1.bf16.msra.mxu0 %v393
    %539 = vmatprep.subr.bf16.mxu0 0
    %540 = vmatpush1.bf16.msra.mxu0 %v394
    %541 = vmatprep.subr.bf16.mxu0 0
    %542 = vmatpush1.bf16.msra.mxu0 %v395
    %543 = vmatprep.subr.bf16.mxu0 0
    %544 = vmatpush1.bf16.msra.mxu0 %v396
    %545 = vmatprep.subr.bf16.mxu0 0
    %546 = vmatpush1.bf16.msra.mxu0 %v397
    %547 = vmatprep.subr.bf16.mxu0 0
    %548 = vmatpush1.bf16.msra.mxu0 %v398
    %549 = vmatprep.subr.bf16.mxu0 0
    %550 = vmatpush1.bf16.msra.mxu0 %v399
    %551 = vmatprep.subr.bf16.mxu0 0
    %552 = vmatpush1.bf16.msra.mxu0 %v400
    %553 = vmatprep.subr.bf16.mxu0 0
    %554 = vmatpush1.bf16.msra.mxu0 %v401
    %555 = vmatprep.subr.bf16.mxu0 0
    %556 = vmatpush1.bf16.msra.mxu0 %v402
    %557 = vmatprep.subr.bf16.mxu0 0
    %558 = vmatpush1.bf16.msra.mxu0 %v403
    %559 = vmatprep.subr.bf16.mxu0 0
    %560 = vmatpush1.bf16.msra.mxu0 %v404
    %561 = vmatprep.subr.bf16.mxu0 0
    %562 = vmatpush1.bf16.msra.mxu0 %v405
    %563 = vmatprep.subr.bf16.mxu0 0
    %564 = vmatpush1.bf16.msra.mxu0 %v406
    %565 = vmatprep.subr.bf16.mxu0 0
    %566 = vmatpush1.bf16.msra.mxu0 %v407
    %567 = vmatprep.subr.bf16.mxu0 0
    %568 = vmatpush1.bf16.msra.mxu0 %v408
    %569 = vmatprep.mubr.bf16.mxu0 %v162
    %570 = vmatmul.mubr.bf16.gmra.mrb[0].mxu0 %v161
    %v571 = vpop.f32.mrb[0].mxu0
    %v572 = vadd.f32 %v532, %v571
    %v573 = vpop.f32.mrb[0].mxu0
    %v574 = vpop.f32.mrb[0].mxu0
    %v575 = vpop.f32.mrb[0].mxu0
    %576 = vdwg.mxu0
    %577 = vst [vmem:[#allocation7] sm:$0xff] %v572
    // Predicated region
    $region22: #{tpu_custom_call.1} parent=1 // pred_check
      _
    $region23: #{tpu_custom_call.1} parent=1 // pred_check_branch
      %579 = sbr.rel (0) target = $region25
    $region24: #{tpu_custom_call.1} parent=1 // pred_region
      %s581 = ssub.s32 128, 128
      %582 = vsyncadd [#allocation4], %s581
      %s584 = sshll.u32 [#allocation7], 4
      %s585 = int_to_ptr.vmem [resolvable:$true] %s584
      %587 = dma.vmem_to_hbm [thread:$0]  %s585, 128, %s3, [#allocation4]
    $region25: #{tpu_custom_call.1} parent=1 // pred_fallthru
      _
    // Predicated region
    $region26: #{tpu_custom_call.1} parent=1 // pred_check
      _
    $region27: #{tpu_custom_call.1} parent=1 // pred_check_branch
      %589 = sbr.rel (0) target = $region29
    $region28: #{tpu_custom_call.1} parent=1 // pred_region
      %590 = dma.done [#allocation4], 128
    $region29: #{tpu_custom_call.1} parent=1 // pred_fallthru
      _
    %591 = vsyncpa [#allocation3], 1
    %592 = vsyncpa [#allocation6], 1
    %593 = vsyncpa [#allocation4], 1

</llo_original>
